<compile_context>
chip_gen: v7x
topology: tpu7x:2x2x1
jax: 0.10.0
libtpu: 0.0.40
codegen_flags: <defaults>
</compile_context>

<pallas_src>
import functools

import jax
import jax.numpy as jnp
from jax.experimental import pallas as pl
from jax.experimental.pallas import tpu as pltpu

FEAT = 128          # lane-aligned feature width (every per-layer dim padded to this)
NEG_INF = -1e30     # finite "minus infinity" used to mask padded logit lanes


# ----------------------------------------------------------------------------
# Kernel
# ----------------------------------------------------------------------------
def _layers_kernel(state_in_ref, x_ref, w_in_ref, b_in_ref, w_hy_ref, b_hy_ref,
                   y_ref, state_ref, hx_ref, *, num_layers, feat, matmul_dtype):
    t = pl.program_id(1)

    # Load the initial recurrent state into the VMEM-resident output block once
    # per batch block; it acts as the running state across the (arbitrary) t axis.
    @pl.when(t == 0)
    def _():
        state_ref[...] = state_in_ref[...]

    x = x_ref[0]                                       # (BB, F) float32
    for l in range(num_layers):                        # statically unrolled (small L)
        h = state_ref[l]                               # (BB, F) float32

        # Fused [h | x] @ [[W_hh],[W_xh]]  -> one MXU matmul per layer.
        hx_ref[:, 0:feat] = h
        hx_ref[:, feat:2 * feat] = x
        pre = jnp.dot(hx_ref[...].astype(matmul_dtype), w_in_ref[l],
                      preferred_element_type=jnp.float32) + b_in_ref[l]

        # CEC residual update (kept in float32 on the VPU/EUP).
        new_h = h + jnp.tanh(pre)

        # Output head: numerically stable log_softmax over lane-dense logits.
        logits = jnp.dot(new_h.astype(matmul_dtype), w_hy_ref[l],
                         preferred_element_type=jnp.float32) + b_hy_ref[l]
        m = jnp.max(logits, axis=-1, keepdims=True)
        shifted = logits - m
        lse = jnp.log(jnp.sum(jnp.exp(shifted), axis=-1, keepdims=True))
        x = shifted - lse                              # next layer's input

        state_ref[l] = new_h                           # persist per-layer state

    y_ref[0] = x.astype(y_ref.dtype)                   # last layer's output (lane-dense)


# ----------------------------------------------------------------------------
# Wrapper: fused multi-layer, multi-timestep forward
# ----------------------------------------------------------------------------
def layers_seq_forward(x_seq_p, state0_p, packed, *, batch_block=8, feat=FEAT):
    """x_seq_p: (T, B, FEAT) f32 padded inputs; state0_p: (L, B, FEAT) f32 padded states.

    Returns (y_seq_p (T, B, FEAT) f32, state_out_p (L, B, FEAT) f32)."""
    T, B, F = x_seq_p.shape
    L = state0_p.shape[0]
    assert F == feat and B % batch_block == 0
    nb = B // batch_block
    matmul_dtype = packed["w_in"].dtype

    kernel = functools.partial(_layers_kernel, num_layers=L, feat=feat,
                               matmul_dtype=matmul_dtype)

    y_seq, state_out = pl.pallas_call(
        kernel,
        grid=(nb, T),
        in_specs=[
            pl.BlockSpec((L, batch_block, feat), lambda b, t: (0, b, 0)),  # state_in
            pl.BlockSpec((1, batch_block, feat), lambda b, t: (t, b, 0)),  # x_t
            pl.BlockSpec((L, 2 * feat, feat),    lambda b, t: (0, 0, 0)),  # W_in  (resident)
            pl.BlockSpec((L, 1, feat),           lambda b, t: (0, 0, 0)),  # b_in  (resident)
            pl.BlockSpec((L, feat, feat),        lambda b, t: (0, 0, 0)),  # W_hy  (resident)
            pl.BlockSpec((L, 1, feat),           lambda b, t: (0, 0, 0)),  # b_hy  (resident)
        ],
        out_specs=(
            pl.BlockSpec((1, batch_block, feat), lambda b, t: (t, b, 0)),  # y_t
            pl.BlockSpec((L, batch_block, feat), lambda b, t: (0, b, 0)),  # final state
        ),
        out_shape=(
            jax.ShapeDtypeStruct((T, B, feat), jnp.float32),
            jax.ShapeDtypeStruct((L, B, feat), jnp.float32),
        ),
        scratch_shapes=[pltpu.VMEM((batch_block, 2 * feat), jnp.float32)],  # [h | x] staging
        compiler_params=pltpu.CompilerParams(
            dimension_semantics=("parallel", "arbitrary")),  # batch parallel, time sequential
    )(state0_p, x_seq_p,
      packed["w_in"], packed["b_in"], packed["w_hy"], packed["b_hy"])
    return y_seq, state_out


# ----------------------------------------------------------------------------
# Parameters, packing/padding helpers
# ----------------------------------------------------------------------------
def init_layer_params(key, sizes):
    """sizes: list of (x_size, h_size, y_size) per layer, chained y[i] == x[i+1].
    Weights stored as (in, out); biases as (1, out)."""
    params = []
    for (xs, hs, ys) in sizes:
        key, *ks = jax.random.split(key, 7)

        def lin(kw, kb, fan_in, fan_out):
            bound = 1.0 / jnp.sqrt(float(fan_in))
            w = jax.random.uniform(kw, (fan_in, fan_out), jnp.float32, -bound, bound)
            b = jax.random.uniform(kb, (1, fan_out), jnp.float32, -bound, bound)
            return w, b

        w_hh, b_hh = lin(ks[0], ks[1], hs, hs)
        w_xh, b_xh = lin(ks[2], ks[3], xs, hs)
        w_hy, b_hy = lin(ks[4], ks[5], hs, ys)
        params.append(dict(w_hh=w_hh, b_hh=b_hh, w_xh=w_xh, b_xh=b_xh,
                           w_hy=w_hy, b_hy=b_hy, x_size=xs, h_size=hs, y_size=ys))
    return params


def pack_params(layer_params, feat=FEAT, matmul_dtype=jnp.bfloat16):
    """Pad every layer to `feat` lanes and stack over layers. Fuses [W_hh; W_xh]
    and b_hh + b_xh once at pack time (hoisted out of the recurrent loop)."""
    L = len(layer_params)
    w_in = jnp.zeros((L, 2 * feat, feat), jnp.float32)
    b_in = jnp.zeros((L, 1, feat), jnp.float32)
    w_hy = jnp.zeros((L, feat, feat), jnp.float32)
    b_hy = jnp.full((L, 1, feat), NEG_INF, jnp.float32)   # mask padded logit lanes
    for l, p in enumerate(layer_params):
        hs, xs, ys = p["h_size"], p["x_size"], p["y_size"]
        w_in = w_in.at[l, 0:hs, 0:hs].set(p["w_hh"])
        w_in = w_in.at[l, feat:feat + xs, 0:hs].set(p["w_xh"])
        b_in = b_in.at[l, 0, 0:hs].set((p["b_hh"] + p["b_xh"])[0])
        w_hy = w_hy.at[l, 0:hs, 0:ys].set(p["w_hy"])
        b_hy = b_hy.at[l, 0, 0:ys].set(p["b_hy"][0])
    return dict(w_in=w_in.astype(matmul_dtype), b_in=b_in,
                w_hy=w_hy.astype(matmul_dtype), b_hy=b_hy)


def pad_last(a, feat=FEAT):
    pad = feat - a.shape[-1]
    return jnp.pad(a, [(0, 0)] * (a.ndim - 1) + [(0, pad)])


def pack_state(states, feat=FEAT):
    return jnp.stack([pad_last(s, feat) for s in states], axis=0)   # (L, B, feat)


def unpack_state(state_p, layer_params):
    return [state_p[l, :, :p["h_size"]] for l, p in enumerate(layer_params)]


def init_state(key, layer_params, batch_size, std=0.1):
    states = []
    for p in layer_params:
        key, k = jax.random.split(key)
        states.append(std * jax.random.normal(k, (batch_size, p["h_size"]), jnp.float32))
    return states


# ----------------------------------------------------------------------------
# Pure-JAX reference (mirrors the PyTorch Layers forward; same matmul numerics)
# ----------------------------------------------------------------------------
def layers_step_reference(x, states, layer_params, matmul_dtype=jnp.bfloat16):
    md = matmul_dtype
    new_states = []
    for p, h in zip(layer_params, states):
        state_lin = jnp.dot(h.astype(md), p["w_hh"].astype(md),
                            preferred_element_type=jnp.float32) + p["b_hh"]
        input_lin = jnp.dot(x.astype(md), p["w_xh"].astype(md),
                            preferred_element_type=jnp.float32) + p["b_xh"]
        new_h = h + jnp.tanh(state_lin + input_lin)
        logits = jnp.dot(new_h.astype(md), p["w_hy"].astype(md),
                         preferred_element_type=jnp.float32) + p["b_hy"]
        x = jax.nn.log_softmax(logits, axis=-1)
        new_states.append(new_h)
    return x, new_states


def layers_seq_reference(x_seq, states, layer_params, matmul_dtype=jnp.bfloat16):
    ys = []
    for t in range(x_seq.shape[0]):
        y, states = layers_step_reference(x_seq[t], states, layer_params, matmul_dtype)
        ys.append(y)
    return jnp.stack(ys, axis=0), states


# ----------------------------------------------------------------------------
# Demo / self-test
# ----------------------------------------------------------------------------
if __name__ == "__main__":
    T, B = 8, 8                                    # seq len, batch (multiple of 8 sublanes)
    sizes = [(16, 32, 24), (24, 40, 16)]           # per-layer (x, h, y); chained y_i == x_{i+1}

    key = jax.random.PRNGKey(0)
    k_p, k_x, k_s = jax.random.split(key, 3)

    layer_params = init_layer_params(k_p, sizes)
    packed = pack_params(layer_params, matmul_dtype=jnp.bfloat16)

    x_seq = jax.random.normal(k_x, (T, B, sizes[0][0]), jnp.float32)
    states = init_state(k_s, layer_params, batch_size=B, std=0.1)

    # Pad activations/state to lane-aligned width and run the fused kernel.
    x_seq_p = pad_last(x_seq, FEAT)
    state0_p = pack_state(states, FEAT)

    y_seq_p, state_out_p = layers_seq_forward(x_seq_p, state0_p, packed)
    jax.block_until_ready((y_seq_p, state_out_p))

    y = y_seq_p[:, :, :sizes[-1][2]]               # strip padded output lanes
    new_states = unpack_state(state_out_p, layer_params)

    # Reference (same bf16-input / f32-accumulate matmul numerics).
    y_ref, states_ref = layers_seq_reference(x_seq, states, layer_params,
                                             matmul_dtype=jnp.bfloat16)

    # bf16 matmul inputs + different accumulation grouping (fused [h|x] matmul,
    # pre-summed biases) over an 8-step recurrence -> loose absolute tolerance.
    assert jnp.allclose(y, y_ref, rtol=0.0, atol=5e-2), "log-prob output mismatch"
    for s, s_ref in zip(new_states, states_ref):
        assert jnp.allclose(s, s_ref, rtol=0.0, atol=5e-2), "recurrent state mismatch"

    print("KERNEL_OK")
</pallas_src>

<mosaic_0001>
module attributes {stable_mosaic.version = 11 : i64} {
  func.func @_layers_kernel(%arg0: i32, %arg1: i32, %arg2: memref<2x8x128xf32, #tpu.memory_space<vmem>>, %arg3: memref<1x8x128xf32, #tpu.memory_space<vmem>>, %arg4: memref<2x256x128xbf16, #tpu.memory_space<vmem>>, %arg5: memref<2x1x128xf32, #tpu.memory_space<vmem>>, %arg6: memref<2x128x128xbf16, #tpu.memory_space<vmem>>, %arg7: memref<2x1x128xf32, #tpu.memory_space<vmem>>, %arg8: memref<1x8x128xf32, #tpu.memory_space<vmem>>, %arg9: memref<2x8x128xf32, #tpu.memory_space<vmem>>, %arg10: memref<8x256xf32, #tpu.memory_space<vmem>>) attributes {dimension_semantics = [#tpu.dimension_semantics<parallel>, #tpu.dimension_semantics<arbitrary>], iteration_bounds = array<i64: 1, 8>, scalar_prefetch = 0 : i64, scratch_operands = 1 : i64, tpu.core_type = #tpu.core_type<tc>, window_params = [{transform_indices = @transform_0, window_bounds = array<i64: 2, 8, 128>}, {transform_indices = @transform_1, window_bounds = array<i64: 1, 8, 128>}, {pipeline_mode = #tpu.pipeline_mode<synchronous>, transform_indices = @transform_2, window_bounds = array<i64: 2, 256, 128>}, {pipeline_mode = #tpu.pipeline_mode<synchronous>, transform_indices = @transform_3, window_bounds = array<i64: 2, 1, 128>}, {pipeline_mode = #tpu.pipeline_mode<synchronous>, transform_indices = @transform_4, window_bounds = array<i64: 2, 128, 128>}, {pipeline_mode = #tpu.pipeline_mode<synchronous>, transform_indices = @transform_5, window_bounds = array<i64: 2, 1, 128>}, {transform_indices = @transform_6, window_bounds = array<i64: 1, 8, 128>}, {transform_indices = @transform_7, window_bounds = array<i64: 2, 8, 128>}]} {
    %c0_i32 = arith.constant 0 : i32
    %0 = arith.cmpi eq, %arg1, %c0_i32 : i32
    %1 = arith.extui %0 : i1 to i32
    %c0_i32_0 = arith.constant 0 : i32
    %2 = arith.cmpi ne, %1, %c0_i32_0 : i32
    scf.if %2 {
      %c0_59 = arith.constant 0 : index
      %c0_60 = arith.constant 0 : index
      %c0_61 = arith.constant 0 : index
      %80 = vector.load %arg2[%c0_59, %c0_60, %c0_61] : memref<2x8x128xf32, #tpu.memory_space<vmem>>, vector<2x8x128xf32>
      %c0_62 = arith.constant 0 : index
      %c0_63 = arith.constant 0 : index
      %c0_64 = arith.constant 0 : index
      %81 = vector.load %arg9[%c0_62, %c0_63, %c0_64] : memref<2x8x128xf32, #tpu.memory_space<vmem>>, vector<2x8x128xf32>
      tpu.vector_store %arg9[%c0_62, %c0_63, %c0_64], %80 {strides = array<i32>} : memref<2x8x128xf32, #tpu.memory_space<vmem>>, vector<2x8x128xf32>,
    } else {
    }
    %c0 = arith.constant 0 : index
    %c0_1 = arith.constant 0 : index
    %c0_2 = arith.constant 0 : index
    %3 = vector.load %arg3[%c0, %c0_1, %c0_2] : memref<1x8x128xf32, #tpu.memory_space<vmem>>, vector<1x8x128xf32>
    %4 = vector.shape_cast %3 : vector<1x8x128xf32> to vector<8x128xf32>
    %c0_3 = arith.constant 0 : index
    %c0_4 = arith.constant 0 : index
    %c0_5 = arith.constant 0 : index
    %5 = vector.load %arg9[%c0_3, %c0_4, %c0_5] : memref<2x8x128xf32, #tpu.memory_space<vmem>>, vector<1x8x128xf32>
    %6 = vector.shape_cast %5 : vector<1x8x128xf32> to vector<8x128xf32>
    %c0_6 = arith.constant 0 : index
    %c0_7 = arith.constant 0 : index
    %7 = vector.load %arg10[%c0_6, %c0_7] : memref<8x256xf32, #tpu.memory_space<vmem>>, vector<8x128xf32>
    tpu.vector_store %arg10[%c0_6, %c0_7], %6 {strides = array<i32>} : memref<8x256xf32, #tpu.memory_space<vmem>>, vector<8x128xf32>,
    %c0_8 = arith.constant 0 : index
    %c128 = arith.constant 128 : index
    %8 = vector.load %arg10[%c0_8, %c128] : memref<8x256xf32, #tpu.memory_space<vmem>>, vector<8x128xf32>
    tpu.vector_store %arg10[%c0_8, %c128], %4 {strides = array<i32>} : memref<8x256xf32, #tpu.memory_space<vmem>>, vector<8x128xf32>,
    %c0_9 = arith.constant 0 : index
    %c0_10 = arith.constant 0 : index
    %9 = vector.load %arg10[%c0_9, %c0_10] : memref<8x256xf32, #tpu.memory_space<vmem>>, vector<8x256xf32>
    %10 = arith.truncf %9 : vector<8x256xf32> to vector<8x256xbf16>
    %c0_11 = arith.constant 0 : index
    %c0_12 = arith.constant 0 : index
    %c0_13 = arith.constant 0 : index
    %11 = vector.load %arg4[%c0_11, %c0_12, %c0_13] : memref<2x256x128xbf16, #tpu.memory_space<vmem>>, vector<1x256x128xbf16>
    %12 = vector.shape_cast %11 : vector<1x256x128xbf16> to vector<256x128xbf16>
    %cst = arith.constant dense<0.000000e+00> : vector<8x128xf32>
    %13 = tpu.matmul %10, %12, %cst {dimension_numbers = #tpu.dot_dimension_numbers<[1], [0], [0], [1], [0, 0, 1, 1], [], []>} : vector<8x256xbf16>, vector<256x128xbf16>, vector<8x128xf32> -> vector<8x128xf32>
    %c0_14 = arith.constant 0 : index
    %c0_15 = arith.constant 0 : index
    %c0_16 = arith.constant 0 : index
    %14 = vector.load %arg5[%c0_14, %c0_15, %c0_16] : memref<2x1x128xf32, #tpu.memory_space<vmem>>, vector<1x1x128xf32>
    %15 = vector.shape_cast %14 : vector<1x1x128xf32> to vector<1x128xf32>
    %16 = vector.broadcast %15 : vector<1x128xf32> to vector<8x128xf32>
    %17 = arith.addf %13, %16 : vector<8x128xf32>
    %18 = math.tanh %17 : vector<8x128xf32>
    %19 = arith.addf %6, %18 : vector<8x128xf32>
    %20 = arith.truncf %19 : vector<8x128xf32> to vector<8x128xbf16>
    %c0_17 = arith.constant 0 : index
    %c0_18 = arith.constant 0 : index
    %c0_19 = arith.constant 0 : index
    %21 = vector.load %arg6[%c0_17, %c0_18, %c0_19] : memref<2x128x128xbf16, #tpu.memory_space<vmem>>, vector<1x128x128xbf16>
    %22 = vector.shape_cast %21 : vector<1x128x128xbf16> to vector<128x128xbf16>
    %cst_20 = arith.constant dense<0.000000e+00> : vector<8x128xf32>
    %23 = tpu.matmul %20, %22, %cst_20 {dimension_numbers = #tpu.dot_dimension_numbers<[1], [0], [0], [1], [0, 0, 1, 1], [], []>} : vector<8x128xbf16>, vector<128x128xbf16>, vector<8x128xf32> -> vector<8x128xf32>
    %c0_21 = arith.constant 0 : index
    %c0_22 = arith.constant 0 : index
    %c0_23 = arith.constant 0 : index
    %24 = vector.load %arg7[%c0_21, %c0_22, %c0_23] : memref<2x1x128xf32, #tpu.memory_space<vmem>>, vector<1x1x128xf32>
    %25 = vector.shape_cast %24 : vector<1x1x128xf32> to vector<1x128xf32>
    %26 = vector.broadcast %25 : vector<1x128xf32> to vector<8x128xf32>
    %27 = arith.addf %23, %26 : vector<8x128xf32>
    %cst_24 = arith.constant dense<0xFF800000> : vector<8xf32>
    %28 = vector.multi_reduction <maximumf>, %27, %cst_24 [1] : vector<8x128xf32> to vector<8xf32>
    %29 = vector.shape_cast %28 : vector<8xf32> to vector<8x1xf32>
    %30 = vector.broadcast %29 : vector<8x1xf32> to vector<8x128xf32>
    %31 = arith.subf %27, %30 : vector<8x128xf32>
    %32 = math.exp %31 : vector<8x128xf32>
    %cst_25 = arith.constant dense<0.000000e+00> : vector<8xf32>
    %33 = vector.multi_reduction <add>, %32, %cst_25 [1] : vector<8x128xf32> to vector<8xf32>
    %34 = vector.shape_cast %33 : vector<8xf32> to vector<8x1xf32>
    %35 = math.log %34 : vector<8x1xf32>
    %36 = vector.broadcast %35 : vector<8x1xf32> to vector<8x128xf32>
    %37 = arith.subf %31, %36 : vector<8x128xf32>
    %c0_26 = arith.constant 0 : index
    %c0_27 = arith.constant 0 : index
    %c0_28 = arith.constant 0 : index
    %38 = vector.load %arg9[%c0_26, %c0_27, %c0_28] : memref<2x8x128xf32, #tpu.memory_space<vmem>>, vector<1x8x128xf32>
    %39 = vector.shape_cast %38 : vector<1x8x128xf32> to vector<8x128xf32>
    %40 = vector.shape_cast %19 : vector<8x128xf32> to vector<1x8x128xf32>
    tpu.vector_store %arg9[%c0_26, %c0_27, %c0_28], %40 {strides = array<i32>} : memref<2x8x128xf32, #tpu.memory_space<vmem>>, vector<1x8x128xf32>,
    %c1 = arith.constant 1 : index
    %c0_29 = arith.constant 0 : index
    %c0_30 = arith.constant 0 : index
    %41 = vector.load %arg9[%c1, %c0_29, %c0_30] : memref<2x8x128xf32, #tpu.memory_space<vmem>>, vector<1x8x128xf32>
    %42 = vector.shape_cast %41 : vector<1x8x128xf32> to vector<8x128xf32>
    %c0_31 = arith.constant 0 : index
    %c0_32 = arith.constant 0 : index
    %43 = vector.load %arg10[%c0_31, %c0_32] : memref<8x256xf32, #tpu.memory_space<vmem>>, vector<8x128xf32>
    tpu.vector_store %arg10[%c0_31, %c0_32], %42 {strides = array<i32>} : memref<8x256xf32, #tpu.memory_space<vmem>>, vector<8x128xf32>,
    %c0_33 = arith.constant 0 : index
    %c128_34 = arith.constant 128 : index
    %44 = vector.load %arg10[%c0_33, %c128_34] : memref<8x256xf32, #tpu.memory_space<vmem>>, vector<8x128xf32>
    tpu.vector_store %arg10[%c0_33, %c128_34], %37 {strides = array<i32>} : memref<8x256xf32, #tpu.memory_space<vmem>>, vector<8x128xf32>,
    %c0_35 = arith.constant 0 : index
    %c0_36 = arith.constant 0 : index
    %45 = vector.load %arg10[%c0_35, %c0_36] : memref<8x256xf32, #tpu.memory_space<vmem>>, vector<8x256xf32>
    %46 = arith.truncf %45 : vector<8x256xf32> to vector<8x256xbf16>
    %c1_37 = arith.constant 1 : index
    %c0_38 = arith.constant 0 : index
    %c0_39 = arith.constant 0 : index
    %47 = vector.load %arg4[%c1_37, %c0_38, %c0_39] : memref<2x256x128xbf16, #tpu.memory_space<vmem>>, vector<1x256x128xbf16>
    %48 = vector.shape_cast %47 : vector<1x256x128xbf16> to vector<256x128xbf16>
    %cst_40 = arith.constant dense<0.000000e+00> : vector<8x128xf32>
    %49 = tpu.matmul %46, %48, %cst_40 {dimension_numbers = #tpu.dot_dimension_numbers<[1], [0], [0], [1], [0, 0, 1, 1], [], []>} : vector<8x256xbf16>, vector<256x128xbf16>, vector<8x128xf32> -> vector<8x128xf32>
    %c1_41 = arith.constant 1 : index
    %c0_42 = arith.constant 0 : index
    %c0_43 = arith.constant 0 : index
    %50 = vector.load %arg5[%c1_41, %c0_42, %c0_43] : memref<2x1x128xf32, #tpu.memory_space<vmem>>, vector<1x1x128xf32>
    %51 = vector.shape_cast %50 : vector<1x1x128xf32> to vector<1x128xf32>
    %52 = vector.broadcast %51 : vector<1x128xf32> to vector<8x128xf32>
    %53 = arith.addf %49, %52 : vector<8x128xf32>
    %54 = math.tanh %53 : vector<8x128xf32>
    %55 = arith.addf %42, %54 : vector<8x128xf32>
    %56 = arith.truncf %55 : vector<8x128xf32> to vector<8x128xbf16>
    %c1_44 = arith.constant 1 : index
    %c0_45 = arith.constant 0 : index
    %c0_46 = arith.constant 0 : index
    %57 = vector.load %arg6[%c1_44, %c0_45, %c0_46] : memref<2x128x128xbf16, #tpu.memory_space<vmem>>, vector<1x128x128xbf16>
    %58 = vector.shape_cast %57 : vector<1x128x128xbf16> to vector<128x128xbf16>
    %cst_47 = arith.constant dense<0.000000e+00> : vector<8x128xf32>
    %59 = tpu.matmul %56, %58, %cst_47 {dimension_numbers = #tpu.dot_dimension_numbers<[1], [0], [0], [1], [0, 0, 1, 1], [], []>} : vector<8x128xbf16>, vector<128x128xbf16>, vector<8x128xf32> -> vector<8x128xf32>
    %c1_48 = arith.constant 1 : index
    %c0_49 = arith.constant 0 : index
    %c0_50 = arith.constant 0 : index
    %60 = vector.load %arg7[%c1_48, %c0_49, %c0_50] : memref<2x1x128xf32, #tpu.memory_space<vmem>>, vector<1x1x128xf32>
    %61 = vector.shape_cast %60 : vector<1x1x128xf32> to vector<1x128xf32>
    %62 = vector.broadcast %61 : vector<1x128xf32> to vector<8x128xf32>
    %63 = arith.addf %59, %62 : vector<8x128xf32>
    %cst_51 = arith.constant dense<0xFF800000> : vector<8xf32>
    %64 = vector.multi_reduction <maximumf>, %63, %cst_51 [1] : vector<8x128xf32> to vector<8xf32>
    %65 = vector.shape_cast %64 : vector<8xf32> to vector<8x1xf32>
    %66 = vector.broadcast %65 : vector<8x1xf32> to vector<8x128xf32>
    %67 = arith.subf %63, %66 : vector<8x128xf32>
    %68 = math.exp %67 : vector<8x128xf32>
    %cst_52 = arith.constant dense<0.000000e+00> : vector<8xf32>
    %69 = vector.multi_reduction <add>, %68, %cst_52 [1] : vector<8x128xf32> to vector<8xf32>
    %70 = vector.shape_cast %69 : vector<8xf32> to vector<8x1xf32>
    %71 = math.log %70 : vector<8x1xf32>
    %72 = vector.broadcast %71 : vector<8x1xf32> to vector<8x128xf32>
    %73 = arith.subf %67, %72 : vector<8x128xf32>
    %c1_53 = arith.constant 1 : index
    %c0_54 = arith.constant 0 : index
    %c0_55 = arith.constant 0 : index
    %74 = vector.load %arg9[%c1_53, %c0_54, %c0_55] : memref<2x8x128xf32, #tpu.memory_space<vmem>>, vector<1x8x128xf32>
    %75 = vector.shape_cast %74 : vector<1x8x128xf32> to vector<8x128xf32>
    %76 = vector.shape_cast %55 : vector<8x128xf32> to vector<1x8x128xf32>
    tpu.vector_store %arg9[%c1_53, %c0_54, %c0_55], %76 {strides = array<i32>} : memref<2x8x128xf32, #tpu.memory_space<vmem>>, vector<1x8x128xf32>,
    %c0_56 = arith.constant 0 : index
    %c0_57 = arith.constant 0 : index
    %c0_58 = arith.constant 0 : index
    %77 = vector.load %arg8[%c0_56, %c0_57, %c0_58] : memref<1x8x128xf32, #tpu.memory_space<vmem>>, vector<1x8x128xf32>
    %78 = vector.shape_cast %77 : vector<1x8x128xf32> to vector<8x128xf32>
    %79 = vector.shape_cast %73 : vector<8x128xf32> to vector<1x8x128xf32>
    tpu.vector_store %arg8[%c0_56, %c0_57, %c0_58], %79 {strides = array<i32>} : memref<1x8x128xf32, #tpu.memory_space<vmem>>, vector<1x8x128xf32>,
    return
  }
  func.func @transform_0(%arg0: i32, %arg1: i32) -> (i32, i32, i32) {
    %c0_i32 = arith.constant 0 : i32
    %c0_i32_0 = arith.constant 0 : i32
    %c0_i32_1 = arith.constant 0 : i32
    return %c0_i32, %arg0, %c0_i32_0 : i32, i32, i32
  }
  func.func @transform_1(%arg0: i32, %arg1: i32) -> (i32, i32, i32) {
    %c0_i32 = arith.constant 0 : i32
    %c0_i32_0 = arith.constant 0 : i32
    return %arg1, %arg0, %c0_i32 : i32, i32, i32
  }
  func.func @transform_2(%arg0: i32, %arg1: i32) -> (i32, i32, i32) {
    %c0_i32 = arith.constant 0 : i32
    %c0_i32_0 = arith.constant 0 : i32
    %c0_i32_1 = arith.constant 0 : i32
    %c0_i32_2 = arith.constant 0 : i32
    return %c0_i32, %c0_i32_0, %c0_i32_1 : i32, i32, i32
  }
  func.func @transform_3(%arg0: i32, %arg1: i32) -> (i32, i32, i32) {
    %c0_i32 = arith.constant 0 : i32
    %c0_i32_0 = arith.constant 0 : i32
    %c0_i32_1 = arith.constant 0 : i32
    %c0_i32_2 = arith.constant 0 : i32
    return %c0_i32, %c0_i32_0, %c0_i32_1 : i32, i32, i32
  }
  func.func @transform_4(%arg0: i32, %arg1: i32) -> (i32, i32, i32) {
    %c0_i32 = arith.constant 0 : i32
    %c0_i32_0 = arith.constant 0 : i32
    %c0_i32_1 = arith.constant 0 : i32
    %c0_i32_2 = arith.constant 0 : i32
    return %c0_i32, %c0_i32_0, %c0_i32_1 : i32, i32, i32
  }
  func.func @transform_5(%arg0: i32, %arg1: i32) -> (i32, i32, i32) {
    %c0_i32 = arith.constant 0 : i32
    %c0_i32_0 = arith.constant 0 : i32
    %c0_i32_1 = arith.constant 0 : i32
    %c0_i32_2 = arith.constant 0 : i32
    return %c0_i32, %c0_i32_0, %c0_i32_1 : i32, i32, i32
  }
  func.func @transform_6(%arg0: i32, %arg1: i32) -> (i32, i32, i32) {
    %c0_i32 = arith.constant 0 : i32
    %c0_i32_0 = arith.constant 0 : i32
    return %arg1, %arg0, %c0_i32 : i32, i32, i32
  }
  func.func @transform_7(%arg0: i32, %arg1: i32) -> (i32, i32, i32) {
    %c0_i32 = arith.constant 0 : i32
    %c0_i32_0 = arith.constant 0 : i32
    %c0_i32_1 = arith.constant 0 : i32
    return %c0_i32, %arg0, %c0_i32_0 : i32, i32, i32
  }
}

</mosaic_0001>

<llo_original>
// kernel: tpu_custom_call.1
$region0: #{tpu_custom_call.1}
  #allocation0 [shape = 'u32[]', space=smem, size = 0x4, offset = 0x4, fixed_abs, tag = 'smem constant byte address 0x4 - core index']
  #allocation1 [shape = 'u32[144,128]{1,0:T(1,128)}', space=vmem, size = 0x12000, scoped, tag = 'internal scratch']
  #allocation2 [shape = 'f32[8,256]{1,0:T(8,128)}', space=vmem, size = 0x2000, scoped, tag = 'scratch operand']
  %s0 = inlined_call_operand.hbm [shape: f32[2,8,128], index: 0, kind: input, shape index: {}]
  %s1 = inlined_call_operand.hbm [shape: f32[8,8,128], index: 1, kind: input, shape index: {}]
  %s2 = inlined_call_operand.hbm [shape: bf16[2,256,128], index: 2, kind: input, shape index: {}]
  %s3 = inlined_call_operand.vmem [shape: f32[2,1,128], index: 3, kind: input, shape index: {}]
  %s4 = inlined_call_operand.hbm [shape: bf16[2,128,128], index: 4, kind: input, shape index: {}]
  %s5 = inlined_call_operand.vmem [shape: f32[2,1,128], index: 5, kind: input, shape index: {}]
  %s6 = inlined_call_operand.hbm [shape: f32[8,8,128], index: 6, kind: output, shape index: {0}]
  %s7 = inlined_call_operand.hbm [shape: f32[2,8,128], index: 7, kind: output, shape index: {1}]
  %8 = xla_tuple %s6, %s7
  %s9 = sld [smem:[#allocation0]]
  $region85: #{tpu_custom_call.1} parent=0
    _
  %s11 = ssub.s32 1, %s9
  %s12 = scalar_select 0, %s11, %s9
  $region1: #{tpu_custom_call.1} parent=0
    #allocation3 [shape = 'u8[8192]{0}', space=vmem, size = 0x2000, scoped, tag = 'input window, operand 0, single buffered']
    #allocation4 [shape = 's32[2]{0}', space=sflag, size = 0x8, scoped, tag = 'scoped memory for tpu_custom_call.1']
    #allocation5 [shape = 's32[2]{0}', space=sflag, size = 0x8, scoped, tag = 'scoped memory for tpu_custom_call.1']
    #allocation6 [shape = 'u8[8192]{0}', space=vmem, size = 0x2000, scoped, tag = 'input window, operand 1']
    #allocation7 [shape = 's32[2]{0}', space=sflag, size = 0x8, scoped, tag = 'scoped memory for tpu_custom_call.1']
    #allocation8 [shape = 'u8[131072]{0}', space=vmem, size = 0x20000, scoped, tag = 'input window, operand 2, single buffered']
    #allocation9 [shape = 'u8[65536]{0}', space=vmem, size = 0x10000, scoped, tag = 'input window, operand 4, single buffered']
    #allocation10 [shape = 's32[1]{0}', space=sflag, size = 0x4, scoped, tag = 'scoped memory for tpu_custom_call.1']
    #allocation11 [shape = 'u8[8192]{0}', space=vmem, size = 0x2000, scoped, tag = 'output window, operand 0']
    #allocation12 [shape = 'u8[8192]{0}', space=vmem, size = 0x2000, scoped, tag = 'output window, operand 1, single buffered']
    #allocation13 [shape = 's32[1]{0}', space=sflag, size = 0x4, scoped, tag = 'scoped memory for tpu_custom_call.1']
    %13 = vsyncpa [#allocation4], 0
    %14 = vsyncpa [#allocation7], 0
    %s15 = scalar_lea.sflag [#allocation7], 1
    %16 = vsyncpa %s15, 0
    %17 = vsyncpa [#allocation10], 0
    %18 = vsyncpa [#allocation5], 0
    %s19 = scalar_lea.sflag [#allocation5], 1
    %20 = vsyncpa %s19, 0
    %21 = vsyncpa [#allocation13], 0
    loop: start=0, step=1, limit=10
    $region2: #{tpu_custom_call.1} parent=1 // loop_pre_header
      _
    $region3: #{tpu_custom_call.1} parent=1 // loop_header
      %s23 = sphi 0, %s27
      %p24 = scmp.ge.s32.totalorder %s23, 10
      %s30 = sphi 0, %s42
      %s31 = sphi 0, %s38
      %s32 = sphi 0, %s30
      %s33 = sphi 0, %s31
      %s34 = sphi 0, %s32
      %s35 = sphi 0, %s33
      %s45 = sphi 0, %s47
      %s48 = sphi 0, %s45
      %s49 = sphi 0, %s48
      %s65 = sphi 0, %s49
      %s73 = sphi 0, %s75
      %s76 = sphi 0, %s73
      %s77 = sphi 0, %s76
      %s93 = sphi 0, %s77
      %s97 = sphi 0, %s97
      %s99 = sphi 0, %s97
      %s100 = sphi 0, %s99
      %s114 = sphi 0, %s100
      %s118 = sphi 0, %s118
      %s120 = sphi 0, %s118
      %s121 = sphi 0, %s120
      %s135 = sphi 0, %s121
      %s139 = sphi 0, %s139
      %s141 = sphi 0, %s139
      %s142 = sphi 0, %s141
      %s156 = sphi 0, %s142
      %s160 = sphi 0, %s160
      %s162 = sphi 0, %s160
      %s163 = sphi 0, %s162
      %s177 = sphi 0, %s163
      %s185 = sphi 0, %s187
      %s188 = sphi 0, %s185
      %s189 = sphi 0, %s188
      %s205 = sphi 0, %s189
      %s211 = sphi 0, %s213
      %s214 = sphi 0, %s211
      %s215 = sphi 0, %s214
      %s231 = sphi 0, %s215
    $region4: #{tpu_custom_call.1} parent=1 // loop_header_branch
      %26 = sbr.rel (%p24) target = $region8
    $region5: #{tpu_custom_call.1} parent=1 // loop_body
      %s28 = ssub.s32 %s23, 1
      %s29 = ssub.s32 %s23, 2
      %s36 = sadd.s32 1, %s31
      %p37 = scmp.ge.s32.totalorder %s36, 8
      %s38 = scalar_select %p37, 0, %s36
      %s39 = sadd.s32 1, %s30
      %s40 = scalar_select %p37, %s39, %s30
      %p41 = scmp.ge.s32.totalorder %s40, 1
      %s42 = scalar_select %p41, 0, %s40
      %s43 = ssub.s32 %s30, %s42
      %p44 = scmp.eq.s32.totalorder %s43, 0
      %s46 = sadd.s32 %s45, 1
      %s47 = scalar_select %p44, %s45, %s46
      %p50 = pneg %p44
      %p51 = scmp.eq.s32.totalorder %s23, 7
      %p52 = por %p50, %p51
      %p53 = scmp.ne.s32.totalorder %s45, %s48
      %p54 = scmp.eq.s32.totalorder %s23, 0
      %p55 = por %p53, %p54
      %p56 = scmp.ne.s32.totalorder %s45, %s48
      %p57 = scmp.eq.s32.totalorder %s28, 7
      %p58 = por %p56, %p57
      %p59 = scmp.ne.s32.totalorder %s48, %s49
      %p60 = scmp.eq.s32.totalorder %s28, 0
      %p61 = por %p59, %p60
      %p62 = scmp.ne.s32.totalorder %s48, %s49
      %p63 = scmp.eq.s32.totalorder %s29, 7
      %p64 = por %p62, %p63
      %p66 = scmp.ne.s32.totalorder %s49, %s65
      %p67 = scmp.eq.s32.totalorder %s29, 0
      %p68 = por %p66, %p67
      %s69 = ssub.s32 %s31, %s38
      %s70 = ssub.s32 %s30, %s42
      %s71 = sor.u32 %s69, %s70
      %p72 = scmp.eq.s32.totalorder %s71, 0
      %s74 = sadd.s32 %s73, 1
      %s75 = scalar_select %p72, %s73, %s74
      %p78 = pneg %p72
      %p79 = scmp.eq.s32.totalorder %s23, 7
      %p80 = por %p78, %p79
      %p81 = scmp.ne.s32.totalorder %s73, %s76
      %p82 = scmp.eq.s32.totalorder %s23, 0
      %p83 = por %p81, %p82
      %p84 = scmp.ne.s32.totalorder %s73, %s76
      %p85 = scmp.eq.s32.totalorder %s28, 7
      %p86 = por %p84, %p85
      %p87 = scmp.ne.s32.totalorder %s76, %s77
      %p88 = scmp.eq.s32.totalorder %s28, 0
      %p89 = por %p87, %p88
      %p90 = scmp.ne.s32.totalorder %s76, %s77
      %p91 = scmp.eq.s32.totalorder %s29, 7
      %p92 = por %p90, %p91
      %p94 = scmp.ne.s32.totalorder %s77, %s93
      %p95 = scmp.eq.s32.totalorder %s29, 0
      %p96 = por %p94, %p95
      %s98 = sadd.s32 %s97, 1
      %p101 = scmp.eq.s32.totalorder %s23, 7
      %p102 = scmp.ne.s32.totalorder %s97, %s99
      %p103 = scmp.eq.s32.totalorder %s23, 0
      %p104 = por %p102, %p103
      %p105 = scmp.ne.s32.totalorder %s97, %s99
      %p106 = scmp.eq.s32.totalorder %s28, 7
      %p107 = por %p105, %p106
      %p108 = scmp.ne.s32.totalorder %s99, %s100
      %p109 = scmp.eq.s32.totalorder %s28, 0
      %p110 = por %p108, %p109
      %p111 = scmp.ne.s32.totalorder %s99, %s100
      %p112 = scmp.eq.s32.totalorder %s29, 7
      %p113 = por %p111, %p112
      %p115 = scmp.ne.s32.totalorder %s100, %s114
      %p116 = scmp.eq.s32.totalorder %s29, 0
      %p117 = por %p115, %p116
      %s119 = sadd.s32 %s118, 1
      %p122 = scmp.eq.s32.totalorder %s23, 7
      %p123 = scmp.ne.s32.totalorder %s118, %s120
      %p124 = scmp.eq.s32.totalorder %s23, 0
      %p125 = por %p123, %p124
      %p126 = scmp.ne.s32.totalorder %s118, %s120
      %p127 = scmp.eq.s32.totalorder %s28, 7
      %p128 = por %p126, %p127
      %p129 = scmp.ne.s32.totalorder %s120, %s121
      %p130 = scmp.eq.s32.totalorder %s28, 0
      %p131 = por %p129, %p130
      %p132 = scmp.ne.s32.totalorder %s120, %s121
      %p133 = scmp.eq.s32.totalorder %s29, 7
      %p134 = por %p132, %p133
      %p136 = scmp.ne.s32.totalorder %s121, %s135
      %p137 = scmp.eq.s32.totalorder %s29, 0
      %p138 = por %p136, %p137
      %s140 = sadd.s32 %s139, 1
      %p143 = scmp.eq.s32.totalorder %s23, 7
      %p144 = scmp.ne.s32.totalorder %s139, %s141
      %p145 = scmp.eq.s32.totalorder %s23, 0
      %p146 = por %p144, %p145
      %p147 = scmp.ne.s32.totalorder %s139, %s141
      %p148 = scmp.eq.s32.totalorder %s28, 7
      %p149 = por %p147, %p148
      %p150 = scmp.ne.s32.totalorder %s141, %s142
      %p151 = scmp.eq.s32.totalorder %s28, 0
      %p152 = por %p150, %p151
      %p153 = scmp.ne.s32.totalorder %s141, %s142
      %p154 = scmp.eq.s32.totalorder %s29, 7
      %p155 = por %p153, %p154
      %p157 = scmp.ne.s32.totalorder %s142, %s156
      %p158 = scmp.eq.s32.totalorder %s29, 0
      %p159 = por %p157, %p158
      %s161 = sadd.s32 %s160, 1
      %p164 = scmp.eq.s32.totalorder %s23, 7
      %p165 = scmp.ne.s32.totalorder %s160, %s162
      %p166 = scmp.eq.s32.totalorder %s23, 0
      %p167 = por %p165, %p166
      %p168 = scmp.ne.s32.totalorder %s160, %s162
      %p169 = scmp.eq.s32.totalorder %s28, 7
      %p170 = por %p168, %p169
      %p171 = scmp.ne.s32.totalorder %s162, %s163
      %p172 = scmp.eq.s32.totalorder %s28, 0
      %p173 = por %p171, %p172
      %p174 = scmp.ne.s32.totalorder %s162, %s163
      %p175 = scmp.eq.s32.totalorder %s29, 7
      %p176 = por %p174, %p175
      %p178 = scmp.ne.s32.totalorder %s163, %s177
      %p179 = scmp.eq.s32.totalorder %s29, 0
      %p180 = por %p178, %p179
      %s181 = ssub.s32 %s31, %s38
      %s182 = ssub.s32 %s30, %s42
      %s183 = sor.u32 %s181, %s182
      %p184 = scmp.eq.s32.totalorder %s183, 0
      %s186 = sadd.s32 %s185, 1
      %s187 = scalar_select %p184, %s185, %s186
      %p190 = pneg %p184
      %p191 = scmp.eq.s32.totalorder %s23, 7
      %p192 = por %p190, %p191
      %p193 = scmp.ne.s32.totalorder %s185, %s188
      %p194 = scmp.eq.s32.totalorder %s23, 0
      %p195 = por %p193, %p194
      %p196 = scmp.ne.s32.totalorder %s185, %s188
      %p197 = scmp.eq.s32.totalorder %s28, 7
      %p198 = por %p196, %p197
      %p199 = scmp.ne.s32.totalorder %s188, %s189
      %p200 = scmp.eq.s32.totalorder %s28, 0
      %p201 = por %p199, %p200
      %p202 = scmp.ne.s32.totalorder %s188, %s189
      %p203 = scmp.eq.s32.totalorder %s29, 7
      %p204 = por %p202, %p203
      %p206 = scmp.ne.s32.totalorder %s189, %s205
      %p207 = scmp.eq.s32.totalorder %s29, 0
      %p208 = por %p206, %p207
      %s209 = ssub.s32 %s30, %s42
      %p210 = scmp.eq.s32.totalorder %s209, 0
      %s212 = sadd.s32 %s211, 1
      %s213 = scalar_select %p210, %s211, %s212
      %p216 = pneg %p210
      %p217 = scmp.eq.s32.totalorder %s23, 7
      %p218 = por %p216, %p217
      %p219 = scmp.ne.s32.totalorder %s211, %s214
      %p220 = scmp.eq.s32.totalorder %s23, 0
      %p221 = por %p219, %p220
      %p222 = scmp.ne.s32.totalorder %s211, %s214
      %p223 = scmp.eq.s32.totalorder %s28, 7
      %p224 = por %p222, %p223
      %p225 = scmp.ne.s32.totalorder %s214, %s215
      %p226 = scmp.eq.s32.totalorder %s28, 0
      %p227 = por %p225, %p226
      %p228 = scmp.ne.s32.totalorder %s214, %s215
      %p229 = scmp.eq.s32.totalorder %s29, 7
      %p230 = por %p228, %p229
      %p232 = scmp.ne.s32.totalorder %s215, %s231
      %p233 = scmp.eq.s32.totalorder %s29, 0
      %p234 = por %p232, %p233
      %p235 = scmp.le.s32.totalorder 1, %s23
      %p236 = scmp.lt.s32.totalorder %s23, 9
      %p237 = pnand %p235, %p236
      %p238 = pneg %p237
      // Predicated region
      $region9: #{tpu_custom_call.1} parent=5 // pred_check
        _
      $region10: #{tpu_custom_call.1} parent=5 // pred_check_branch
        %240 = sbr.rel (%p237) target = $region12
      $region11: #{tpu_custom_call.1} parent=5 // pred_region
        %s241 = ssub.s32 %s23, 1
        // Predicated region
        $region13: #{tpu_custom_call.1} parent=11 // pred_check
          %p242 = pneg %p61
        $region14: #{tpu_custom_call.1} parent=11 // pred_check_branch
          %244 = sbr.rel (%p242) target = $region16
        $region15: #{tpu_custom_call.1} parent=11 // pred_region
          %s246 = ssub.s32 256, 256
          %247 = vsyncadd [#allocation4], %s246
          %s248 = smul.addr %s32, 128
          %s249 = scalar_lea.hbm %s0, %s248
          %s250 = sshll.u32 [#allocation3], 4
          %s251 = int_to_ptr.vmem [resolvable:$true] %s250
          %256 = dma.hbm_to_vmem [thread:$0]  %s249, 256, %s251, [#allocation4], 128, 128, 8
        $region16: #{tpu_custom_call.1} parent=11 // pred_fallthru
          _
        // Predicated region
        $region17: #{tpu_custom_call.1} parent=11 // pred_check
          %p257 = pneg %p110
        $region18: #{tpu_custom_call.1} parent=11 // pred_check_branch
          %259 = sbr.rel (%p257) target = $region20
        $region19: #{tpu_custom_call.1} parent=11 // pred_region
          %s261 = ssub.s32 4096, 4096
          %262 = vsyncadd [#allocation7], %s261
          %s263 = sshll.u32 [#allocation8], 4
          %s264 = int_to_ptr.vmem [resolvable:$true] %s263
          %269 = dma.hbm_to_vmem [thread:$0]  %s2, 4096, %s264, [#allocation7], 64, 64, 4
        $region20: #{tpu_custom_call.1} parent=11 // pred_fallthru
          _
        // Predicated region
        $region21: #{tpu_custom_call.1} parent=11 // pred_check
          %p270 = pneg %p131
        $region22: #{tpu_custom_call.1} parent=11 // pred_check_branch
          %272 = sbr.rel (%p270) target = $region24
        $region23: #{tpu_custom_call.1} parent=11 // pred_region
          _
        $region24: #{tpu_custom_call.1} parent=11 // pred_fallthru
          _
        // Predicated region
        $region25: #{tpu_custom_call.1} parent=11 // pred_check
          %p273 = pneg %p152
        $region26: #{tpu_custom_call.1} parent=11 // pred_check_branch
          %275 = sbr.rel (%p273) target = $region28
        $region27: #{tpu_custom_call.1} parent=11 // pred_region
          %s277 = ssub.s32 2048, 2048
          %278 = vsyncadd [#allocation10], %s277
          %s279 = sshll.u32 [#allocation9], 4
          %s280 = int_to_ptr.vmem [resolvable:$true] %s279
          %285 = dma.hbm_to_vmem [thread:$0]  %s4, 2048, %s280, [#allocation10], 64, 64, 4
        $region28: #{tpu_custom_call.1} parent=11 // pred_fallthru
          _
        // Predicated region
        $region29: #{tpu_custom_call.1} parent=11 // pred_check
          %p286 = pneg %p173
        $region30: #{tpu_custom_call.1} parent=11 // pred_check_branch
          %288 = sbr.rel (%p286) target = $region32
        $region31: #{tpu_custom_call.1} parent=11 // pred_region
          _
        $region32: #{tpu_custom_call.1} parent=11 // pred_fallthru
          _
      $region12: #{tpu_custom_call.1} parent=5 // pred_fallthru
        _
      %p289 = scmp.lt.s32.totalorder %s23, 8
      // Predicated region
      $region33: #{tpu_custom_call.1} parent=5 // pred_check
        %p290 = pneg %p289
      $region34: #{tpu_custom_call.1} parent=5 // pred_check_branch
        %292 = sbr.rel (%p290) target = $region36
      $region35: #{tpu_custom_call.1} parent=5 // pred_region
        // Predicated region
        $region37: #{tpu_custom_call.1} parent=35 // pred_check
          %p293 = pneg %p83
        $region38: #{tpu_custom_call.1} parent=35 // pred_check_branch
          %295 = sbr.rel (%p293) target = $region40
        $region39: #{tpu_custom_call.1} parent=35 // pred_region
          %s296 = sand.u32 %s23, 1
          %s297 = scalar_lea.sflag [#allocation7], %s296
          %s298 = sand.u32 %s73, 1
          %s299 = smul.addr %s298, 8
          %s300 = scalar_lea.vmem [#allocation6], %s299
          %s302 = ssub.s32 128, 128
          %303 = vsyncadd %s297, %s302
          %s304 = sadd.s32 %s30, %s31
          %s305 = smul.addr %s304, 128
          %s306 = scalar_lea.hbm %s1, %s305
          %s308 = sshll.u32 %s300, 4
          %s309 = int_to_ptr.vmem [resolvable:$true] %s308
          %311 = dma.hbm_to_vmem [thread:$0]  %s306, 128, %s309, %s297
        $region40: #{tpu_custom_call.1} parent=35 // pred_fallthru
          _
      $region36: #{tpu_custom_call.1} parent=5 // pred_fallthru
        _
      %p312 = scmp.le.s32.totalorder 1, %s23
      %p313 = scmp.lt.s32.totalorder %s23, 9
      %p314 = pnand %p312, %p313
      %p315 = pneg %p314
      // Predicated region
      $region41: #{tpu_custom_call.1} parent=5 // pred_check
        _
      $region42: #{tpu_custom_call.1} parent=5 // pred_check_branch
        %317 = sbr.rel (%p314) target = $region44
      $region43: #{tpu_custom_call.1} parent=5 // pred_region
        %s318 = ssub.s32 %s23, 1
        // Predicated region
        $region45: #{tpu_custom_call.1} parent=43 // pred_check
          %p319 = pneg %p61
        $region46: #{tpu_custom_call.1} parent=43 // pred_check_branch
          %321 = sbr.rel (%p319) target = $region48
        $region47: #{tpu_custom_call.1} parent=43 // pred_region
          %322 = dma.done [#allocation4], 256
        $region48: #{tpu_custom_call.1} parent=43 // pred_fallthru
          _
        %s323 = sand.u32 %s28, 1
        %s324 = scalar_lea.sflag [#allocation7], %s323
        %s325 = sand.u32 %s76, 1
        %s326 = smul.addr %s325, 8
        %s327 = scalar_lea.vmem [#allocation6], %s326
        // Predicated region
        $region49: #{tpu_custom_call.1} parent=43 // pred_check
          %p328 = pneg %p89
        $region50: #{tpu_custom_call.1} parent=43 // pred_check_branch
          %330 = sbr.rel (%p328) target = $region52
        $region51: #{tpu_custom_call.1} parent=43 // pred_region
          %331 = dma.done %s324, 128
        $region52: #{tpu_custom_call.1} parent=43 // pred_fallthru
          _
        // Predicated region
        $region53: #{tpu_custom_call.1} parent=43 // pred_check
          %p332 = pneg %p110
        $region54: #{tpu_custom_call.1} parent=43 // pred_check_branch
          %334 = sbr.rel (%p332) target = $region56
        $region55: #{tpu_custom_call.1} parent=43 // pred_region
          %335 = dma.done [#allocation7], 4096
        $region56: #{tpu_custom_call.1} parent=43 // pred_fallthru
          _
        // Predicated region
        $region57: #{tpu_custom_call.1} parent=43 // pred_check
          %p336 = pneg %p152
        $region58: #{tpu_custom_call.1} parent=43 // pred_check_branch
          %338 = sbr.rel (%p336) target = $region60
        $region59: #{tpu_custom_call.1} parent=43 // pred_region
          %339 = dma.done [#allocation10], 2048
        $region60: #{tpu_custom_call.1} parent=43 // pred_fallthru
          _
        %p340 = pneg %p61
        %p341 = pneg %p58
        %s342 = sand.u32 %s28, 1
        %s343 = scalar_lea.sflag [#allocation7], %s342
        %s344 = sand.u32 %s76, 1
        %s345 = smul.addr %s344, 8
        %s346 = scalar_lea.vmem [#allocation6], %s345
        %p347 = pneg %p89
        %p348 = pneg %p86
        %p349 = pneg %p110
        %p350 = pneg %p107
        %p351 = pneg %p131
        %p352 = pneg %p128
        %p353 = pneg %p152
        %p354 = pneg %p149
        %p355 = pneg %p173
        %p356 = pneg %p170
        %p357 = pneg %p201
        %p358 = pneg %p198
        %s359 = sand.u32 %s188, 1
        %s360 = scalar_lea.sflag [#allocation5], %s359
        %s361 = sand.u32 %s188, 1
        %s362 = smul.addr %s361, 8
        %s363 = scalar_lea.vmem [#allocation11], %s362
        %p364 = pneg %p227
        %p365 = pneg %p224
        %p367 = scmp.eq.s32.totalorder %s33, 0
        // Predicated region
        $region61: #{tpu_custom_call.1} parent=43 // pred_check
          %p368 = pneg %p367
        $region62: #{tpu_custom_call.1} parent=43 // pred_check_branch
          %370 = sbr.rel (%p368) target = $region64
        $region63: #{tpu_custom_call.1} parent=43 // pred_region
          %v371 = vld [vmem:[#allocation3] sm:$0xff]
          %v372 = vld [vmem:[#allocation3 + $0x8] sm:$0xff]
          %373 = vst [vmem:[#allocation12] sm:$0xff] %v371
          %374 = vst [vmem:[#allocation12 + $0x8] sm:$0xff] %v372
        $region64: #{tpu_custom_call.1} parent=43 // pred_fallthru
          _
        %v375 = vld [vmem:[%s327] sm:$0xff]
        %v376 = vld [vmem:[#allocation12] sm:$0xff]
        %377 = vst [vmem:[#allocation2] sm:$0xff] %v376
        %378 = vst [vmem:[#allocation2 + $0x8] sm:$0xff] %v375
        %v379 = vld [vmem:[#allocation2] sm:$0xff]
        %v380 = vld [vmem:[#allocation2 + $0x8] sm:$0xff]
        %v381 = vpack.c.bf16 %v379, %v379
        %v382 = vpack.c.bf16 %v380, %v380
        %v383 = vld [vmem:[#allocation8] sm:$0xf]
        %v384 = vld [vmem:[#allocation8 + $0x4] sm:$0xf]
        %v385 = vld [vmem:[#allocation8 + $0x8] sm:$0xf]
        %v386 = vld [vmem:[#allocation8 + $0xc] sm:$0xf]
        %v387 = vld [vmem:[#allocation8 + $0x10] sm:$0xf]
        %v388 = vld [vmem:[#allocation8 + $0x14] sm:$0xf]
        %v389 = vld [vmem:[#allocation8 + $0x18] sm:$0xf]
        %v390 = vld [vmem:[#allocation8 + $0x1c] sm:$0xf]
        %v391 = vld [vmem:[#allocation8 + $0x20] sm:$0xf]
        %v392 = vld [vmem:[#allocation8 + $0x24] sm:$0xf]
        %v393 = vld [vmem:[#allocation8 + $0x28] sm:$0xf]
        %v394 = vld [vmem:[#allocation8 + $0x2c] sm:$0xf]
        %v395 = vld [vmem:[#allocation8 + $0x30] sm:$0xf]
        %v396 = vld [vmem:[#allocation8 + $0x34] sm:$0xf]
        %v397 = vld [vmem:[#allocation8 + $0x38] sm:$0xf]
        %v398 = vld [vmem:[#allocation8 + $0x3c] sm:$0xf]
        %v399 = vld [vmem:[#allocation8 + $0x40] sm:$0xf]
        %v400 = vld [vmem:[#allocation8 + $0x44] sm:$0xf]
        %v401 = vld [vmem:[#allocation8 + $0x48] sm:$0xf]
        %v402 = vld [vmem:[#allocation8 + $0x4c] sm:$0xf]
        %v403 = vld [vmem:[#allocation8 + $0x50] sm:$0xf]
        %v404 = vld [vmem:[#allocation8 + $0x54] sm:$0xf]
        %v405 = vld [vmem:[#allocation8 + $0x58] sm:$0xf]
        %v406 = vld [vmem:[#allocation8 + $0x5c] sm:$0xf]
        %v407 = vld [vmem:[#allocation8 + $0x60] sm:$0xf]
        %v408 = vld [vmem:[#allocation8 + $0x64] sm:$0xf]
        %v409 = vld [vmem:[#allocation8 + $0x68] sm:$0xf]
        %v410 = vld [vmem:[#allocation8 + $0x6c] sm:$0xf]
        %v411 = vld [vmem:[#allocation8 + $0x70] sm:$0xf]
        %v412 = vld [vmem:[#allocation8 + $0x74] sm:$0xf]
        %v413 = vld [vmem:[#allocation8 + $0x78] sm:$0xf]
        %v414 = vld [vmem:[#allocation8 + $0x7c] sm:$0xf]
        %v415 = vld [vmem:[%s3] sm:$0x1]
        %v417 = vlaneseq
        %v418 = vshrl.u32 %v417, 7
        %v419 = vsub.s32 0, %v418
        %v420 = vrot.slane %v415, %v419
        %v454 = vunpack.c.l.b16 %v383
        %v455 = vunpack.c.l.b16 %v384
        %v456 = vunpack.c.l.b16 %v385
        %v457 = vunpack.c.l.b16 %v386
        %v458 = vunpack.c.l.b16 %v387
        %v459 = vunpack.c.l.b16 %v388
        %v460 = vunpack.c.l.b16 %v389
        %v461 = vunpack.c.l.b16 %v390
        %v462 = vunpack.c.l.b16 %v391
        %v463 = vunpack.c.l.b16 %v392
        %v464 = vunpack.c.l.b16 %v393
        %v465 = vunpack.c.l.b16 %v394
        %v466 = vunpack.c.l.b16 %v395
        %v467 = vunpack.c.l.b16 %v396
        %v468 = vunpack.c.l.b16 %v397
        %v469 = vunpack.c.l.b16 %v398
        %v470 = vunpack.c.l.b16 %v399
        %v471 = vunpack.c.l.b16 %v400
        %v472 = vunpack.c.l.b16 %v401
        %v473 = vunpack.c.l.b16 %v402
        %v474 = vunpack.c.l.b16 %v403
        %v475 = vunpack.c.l.b16 %v404
        %v476 = vunpack.c.l.b16 %v405
        %v477 = vunpack.c.l.b16 %v406
        %v478 = vunpack.c.l.b16 %v407
        %v479 = vunpack.c.l.b16 %v408
        %v480 = vunpack.c.l.b16 %v409
        %v481 = vunpack.c.l.b16 %v410
        %v482 = vunpack.c.l.b16 %v411
        %v483 = vunpack.c.l.b16 %v412
        %v484 = vunpack.c.l.b16 %v413
        %v485 = vunpack.c.l.b16 %v414
        %v486 = vpack.c.b16 %v455, %v454
        %v487 = vpack.c.b16 %v457, %v456
        %v488 = vpack.c.b16 %v459, %v458
        %v489 = vpack.c.b16 %v461, %v460
        %v490 = vpack.c.b16 %v463, %v462
        %v491 = vpack.c.b16 %v465, %v464
        %v492 = vpack.c.b16 %v467, %v466
        %v493 = vpack.c.b16 %v469, %v468
        %v494 = vpack.c.b16 %v471, %v470
        %v495 = vpack.c.b16 %v473, %v472
        %v496 = vpack.c.b16 %v475, %v474
        %v497 = vpack.c.b16 %v477, %v476
        %v498 = vpack.c.b16 %v479, %v478
        %v499 = vpack.c.b16 %v481, %v480
        %v500 = vpack.c.b16 %v483, %v482
        %v501 = vpack.c.b16 %v485, %v484
        %518 = vmatprep.subr.bf16.mxu0 0
        %519 = vmatpush1.bf16.msra.mxu0 %v486
        %520 = vmatprep.subr.bf16.mxu0 0
        %521 = vmatpush1.bf16.msra.mxu0 %v487
        %522 = vmatprep.subr.bf16.mxu0 0
        %523 = vmatpush1.bf16.msra.mxu0 %v488
        %524 = vmatprep.subr.bf16.mxu0 0
        %525 = vmatpush1.bf16.msra.mxu0 %v489
        %526 = vmatprep.subr.bf16.mxu0 0
        %527 = vmatpush1.bf16.msra.mxu0 %v490
        %528 = vmatprep.subr.bf16.mxu0 0
        %529 = vmatpush1.bf16.msra.mxu0 %v491
        %530 = vmatprep.subr.bf16.mxu0 0
        %531 = vmatpush1.bf16.msra.mxu0 %v492
        %532 = vmatprep.subr.bf16.mxu0 0
        %533 = vmatpush1.bf16.msra.mxu0 %v493
        %534 = vmatprep.subr.bf16.mxu0 0
        %535 = vmatpush1.bf16.msra.mxu0 %v494
        %536 = vmatprep.subr.bf16.mxu0 0
        %537 = vmatpush1.bf16.msra.mxu0 %v495
        %538 = vmatprep.subr.bf16.mxu0 0
        %539 = vmatpush1.bf16.msra.mxu0 %v496
        %540 = vmatprep.subr.bf16.mxu0 0
        %541 = vmatpush1.bf16.msra.mxu0 %v497
        %542 = vmatprep.subr.bf16.mxu0 0
        %543 = vmatpush1.bf16.msra.mxu0 %v498
        %544 = vmatprep.subr.bf16.mxu0 0
        %545 = vmatpush1.bf16.msra.mxu0 %v499
        %546 = vmatprep.subr.bf16.mxu0 0
        %547 = vmatpush1.bf16.msra.mxu0 %v500
        %548 = vmatprep.subr.bf16.mxu0 0
        %549 = vmatpush1.bf16.msra.mxu0 %v501
        %550 = vmatprep.mubr.bf16.mxu0 %v382
        %551 = vmatmul.mubr.bf16.gmra.mrb[0].mxu0 %v381
        %v552 = vpop.f32.mrb[0].mxu0
        %v553 = vadd.f32 %v420, %v552
        %v554 = vpop.f32.mrb[0].mxu0
        %v555 = vpop.f32.mrb[0].mxu0
        %v556 = vpop.f32.mrb[0].mxu0
        %557 = vdwg.mxu0
        %v558 = vtanh.pop %v553
        %v559 = vadd.f32 %v376, %v558
        %v560 = vpack.c.bf16 %v559, %v559
        %v561 = vld [vmem:[#allocation9] sm:$0xf]
        %v562 = vld [vmem:[#allocation9 + $0x4] sm:$0xf]
        %v563 = vld [vmem:[#allocation9 + $0x8] sm:$0xf]
        %v564 = vld [vmem:[#allocation9 + $0xc] sm:$0xf]
        %v565 = vld [vmem:[#allocation9 + $0x10] sm:$0xf]
        %v566 = vld [vmem:[#allocation9 + $0x14] sm:$0xf]
        %v567 = vld [vmem:[#allocation9 + $0x18] sm:$0xf]
        %v568 = vld [vmem:[#allocation9 + $0x1c] sm:$0xf]
        %v569 = vld [vmem:[#allocation9 + $0x20] sm:$0xf]
        %v570 = vld [vmem:[#allocation9 + $0x24] sm:$0xf]
        %v571 = vld [vmem:[#allocation9 + $0x28] sm:$0xf]
        %v572 = vld [vmem:[#allocation9 + $0x2c] sm:$0xf]
        %v573 = vld [vmem:[#allocation9 + $0x30] sm:$0xf]
        %v574 = vld [vmem:[#allocation9 + $0x34] sm:$0xf]
        %v575 = vld [vmem:[#allocation9 + $0x38] sm:$0xf]
        %v576 = vld [vmem:[#allocation9 + $0x3c] sm:$0xf]
        %v577 = vld [vmem:[%s5] sm:$0x1]
        %v579 = vlaneseq
        %v580 = vshrl.u32 %v579, 7
        %v581 = vsub.s32 0, %v580
        %v582 = vrot.slane %v577, %v581
        %v600 = vunpack.c.l.b16 %v561
        %v601 = vunpack.c.l.b16 %v562
        %v602 = vunpack.c.l.b16 %v563
        %v603 = vunpack.c.l.b16 %v564
        %v604 = vunpack.c.l.b16 %v565
        %v605 = vunpack.c.l.b16 %v566
        %v606 = vunpack.c.l.b16 %v567
        %v607 = vunpack.c.l.b16 %v568
        %v608 = vunpack.c.l.b16 %v569
        %v609 = vunpack.c.l.b16 %v570
        %v610 = vunpack.c.l.b16 %v571
        %v611 = vunpack.c.l.b16 %v572
        %v612 = vunpack.c.l.b16 %v573
        %v613 = vunpack.c.l.b16 %v574
        %v614 = vunpack.c.l.b16 %v575
        %v615 = vunpack.c.l.b16 %v576
        %v616 = vpack.c.b16 %v601, %v600
        %v617 = vpack.c.b16 %v603, %v602
        %v618 = vpack.c.b16 %v605, %v604
        %v619 = vpack.c.b16 %v607, %v606
        %v620 = vpack.c.b16 %v609, %v608
        %v621 = vpack.c.b16 %v611, %v610
        %v622 = vpack.c.b16 %v613, %v612
        %v623 = vpack.c.b16 %v615, %v614
        %632 = vmatprep.subr.bf16.mxu0 0
        %633 = vmatpush1.bf16.msra.mxu0 %v616
        %634 = vmatprep.subr.bf16.mxu0 0
        %635 = vmatpush1.bf16.msra.mxu0 %v617
        %636 = vmatprep.subr.bf16.mxu0 0
        %637 = vmatpush1.bf16.msra.mxu0 %v618
        %638 = vmatprep.subr.bf16.mxu0 0
        %639 = vmatpush1.bf16.msra.mxu0 %v619
        %640 = vmatprep.subr.bf16.mxu0 0
        %641 = vmatpush1.bf16.msra.mxu0 %v620
        %642 = vmatprep.subr.bf16.mxu0 0
        %643 = vmatpush1.bf16.msra.mxu0 %v621
        %644 = vmatprep.subr.bf16.mxu0 0
        %645 = vmatpush1.bf16.msra.mxu0 %v622
        %646 = vmatprep.subr.bf16.mxu0 0
        %647 = vmatpush1.bf16.msra.mxu0 %v623
        %648 = vmatprep.subr.bf16.mxu0 0
        %649 = vmatpush1.bf16.msra.mxu0 0
        %650 = vmatprep.subr.bf16.mxu0 0
        %651 = vmatpush1.bf16.msra.mxu0 0
        %652 = vmatprep.subr.bf16.mxu0 0
        %653 = vmatpush1.bf16.msra.mxu0 0
        %654 = vmatprep.subr.bf16.mxu0 0
        %655 = vmatpush1.bf16.msra.mxu0 0
        %656 = vmatprep.subr.bf16.mxu0 0
        %657 = vmatpush1.bf16.msra.mxu0 0
        %658 = vmatprep.subr.bf16.mxu0 0
        %659 = vmatpush1.bf16.msra.mxu0 0
        %660 = vmatprep.subr.bf16.mxu0 0
        %661 = vmatpush1.bf16.msra.mxu0 0
        %662 = vmatprep.subr.bf16.mxu0 0
        %663 = vmatpush1.bf16.msra.mxu0 0
        %664 = vmatprep.mubr.bf16.mxu0 0
        %665 = vmatmul.mubr.bf16.gmra.mrb[0].mxu0 %v560
        %v666 = vpop.f32.mrb[0].mxu0
        %v667 = vadd.f32 %v582, %v666
        %v668 = vpop.f32.mrb[0].mxu0
        %v669 = vpop.f32.mrb[0].mxu0
        %v670 = vpop.f32.mrb[0].mxu0
        %671 = vdwg.mxu0
        %672 = vmax.xlane.f32.xlu0 %v667
        %v673 = vpop.xlane.xlu0 %672
        %v674 = vsub.f32 %v667, %v673
        %v675 = vmul.f32 %v674, 1.442695
        %v676 = vpow.pop %v675
        %677 = vadd.xlane.f32.xlu0 %v676
        %v678 = vpop.xlane.xlu0 %677
        %v679 = vlog2.pop %v678
        %v680 = vmul.f32 %v679, 0.6931472
        %v681 = vsub.f32 %v674, %v680
        %682 = vst [vmem:[#allocation12] sm:$0xff] %v559
        %s683 = scalar_lea.vmem [#allocation12], 8
        %v684 = vld [vmem:[%s683] sm:$0xff]
        %685 = vst [vmem:[#allocation2] sm:$0xff] %v684
        %686 = vst [vmem:[#allocation2 + $0x8] sm:$0xff] %v681
        %v687 = vld [vmem:[#allocation2] sm:$0xff]
        %v688 = vld [vmem:[#allocation2 + $0x8] sm:$0xff]
        %v689 = vpack.c.bf16 %v687, %v687
        %v690 = vpack.c.bf16 %v688, %v688
        %s691 = scalar_lea.vmem [#allocation8], 128
        %v692 = vld [vmem:[%s691] sm:$0xf]
        %v693 = vld [vmem:[%s691 + $0x4] sm:$0xf]
        %v694 = vld [vmem:[%s691 + $0x8] sm:$0xf]
        %v695 = vld [vmem:[%s691 + $0xc] sm:$0xf]
        %v696 = vld [vmem:[%s691 + $0x10] sm:$0xf]
        %v697 = vld [vmem:[%s691 + $0x14] sm:$0xf]
        %v698 = vld [vmem:[%s691 + $0x18] sm:$0xf]
        %v699 = vld [vmem:[%s691 + $0x1c] sm:$0xf]
        %v700 = vld [vmem:[%s691 + $0x20] sm:$0xf]
        %v701 = vld [vmem:[%s691 + $0x24] sm:$0xf]
        %v702 = vld [vmem:[%s691 + $0x28] sm:$0xf]
        %v703 = vld [vmem:[%s691 + $0x2c] sm:$0xf]
        %v704 = vld [vmem:[%s691 + $0x30] sm:$0xf]
        %v705 = vld [vmem:[%s691 + $0x34] sm:$0xf]
        %v706 = vld [vmem:[%s691 + $0x38] sm:$0xf]
        %v707 = vld [vmem:[%s691 + $0x3c] sm:$0xf]
        %v708 = vld [vmem:[%s691 + $0x40] sm:$0xf]
        %v709 = vld [vmem:[%s691 + $0x44] sm:$0xf]
        %v710 = vld [vmem:[%s691 + $0x48] sm:$0xf]
        %v711 = vld [vmem:[%s691 + $0x4c] sm:$0xf]
        %v712 = vld [vmem:[%s691 + $0x50] sm:$0xf]
        %v713 = vld [vmem:[%s691 + $0x54] sm:$0xf]
        %v714 = vld [vmem:[%s691 + $0x58] sm:$0xf]
        %v715 = vld [vmem:[%s691 + $0x5c] sm:$0xf]
        %v716 = vld [vmem:[%s691 + $0x60] sm:$0xf]
        %v717 = vld [vmem:[%s691 + $0x64] sm:$0xf]
        %v718 = vld [vmem:[%s691 + $0x68] sm:$0xf]
        %v719 = vld [vmem:[%s691 + $0x6c] sm:$0xf]
        %v720 = vld [vmem:[%s691 + $0x70] sm:$0xf]
        %v721 = vld [vmem:[%s691 + $0x74] sm:$0xf]
        %v722 = vld [vmem:[%s691 + $0x78] sm:$0xf]
        %v723 = vld [vmem:[%s691 + $0x7c] sm:$0xf]
        %s724 = scalar_lea.vmem %s3, 1
        %v725 = vld [vmem:[%s724] sm:$0x1]
        %v727 = vlaneseq
        %v728 = vshrl.u32 %v727, 7
        %v729 = vsub.s32 0, %v728
        %v730 = vrot.slane %v725, %v729
        %v764 = vunpack.c.l.b16 %v692
        %v765 = vunpack.c.l.b16 %v693
        %v766 = vunpack.c.l.b16 %v694
        %v767 = vunpack.c.l.b16 %v695
        %v768 = vunpack.c.l.b16 %v696
        %v769 = vunpack.c.l.b16 %v697
        %v770 = vunpack.c.l.b16 %v698
        %v771 = vunpack.c.l.b16 %v699
        %v772 = vunpack.c.l.b16 %v700
        %v773 = vunpack.c.l.b16 %v701
        %v774 = vunpack.c.l.b16 %v702
        %v775 = vunpack.c.l.b16 %v703
        %v776 = vunpack.c.l.b16 %v704
        %v777 = vunpack.c.l.b16 %v705
        %v778 = vunpack.c.l.b16 %v706
        %v779 = vunpack.c.l.b16 %v707
        %v780 = vunpack.c.l.b16 %v708
        %v781 = vunpack.c.l.b16 %v709
        %v782 = vunpack.c.l.b16 %v710
        %v783 = vunpack.c.l.b16 %v711
        %v784 = vunpack.c.l.b16 %v712
        %v785 = vunpack.c.l.b16 %v713
        %v786 = vunpack.c.l.b16 %v714
        %v787 = vunpack.c.l.b16 %v715
        %v788 = vunpack.c.l.b16 %v716
        %v789 = vunpack.c.l.b16 %v717
        %v790 = vunpack.c.l.b16 %v718
        %v791 = vunpack.c.l.b16 %v719
        %v792 = vunpack.c.l.b16 %v720
        %v793 = vunpack.c.l.b16 %v721
        %v794 = vunpack.c.l.b16 %v722
        %v795 = vunpack.c.l.b16 %v723
        %v796 = vpack.c.b16 %v765, %v764
        %v797 = vpack.c.b16 %v767, %v766
        %v798 = vpack.c.b16 %v769, %v768
        %v799 = vpack.c.b16 %v771, %v770
        %v800 = vpack.c.b16 %v773, %v772
        %v801 = vpack.c.b16 %v775, %v774
        %v802 = vpack.c.b16 %v777, %v776
        %v803 = vpack.c.b16 %v779, %v778
        %v804 = vpack.c.b16 %v781, %v780
        %v805 = vpack.c.b16 %v783, %v782
        %v806 = vpack.c.b16 %v785, %v784
        %v807 = vpack.c.b16 %v787, %v786
        %v808 = vpack.c.b16 %v789, %v788
        %v809 = vpack.c.b16 %v791, %v790
        %v810 = vpack.c.b16 %v793, %v792
        %v811 = vpack.c.b16 %v795, %v794
        %828 = vmatprep.subr.bf16.mxu0 0
        %829 = vmatpush1.bf16.msra.mxu0 %v796
        %830 = vmatprep.subr.bf16.mxu0 0
        %831 = vmatpush1.bf16.msra.mxu0 %v797
        %832 = vmatprep.subr.bf16.mxu0 0
        %833 = vmatpush1.bf16.msra.mxu0 %v798
        %834 = vmatprep.subr.bf16.mxu0 0
        %835 = vmatpush1.bf16.msra.mxu0 %v799
        %836 = vmatprep.subr.bf16.mxu0 0
        %837 = vmatpush1.bf16.msra.mxu0 %v800
        %838 = vmatprep.subr.bf16.mxu0 0
        %839 = vmatpush1.bf16.msra.mxu0 %v801
        %840 = vmatprep.subr.bf16.mxu0 0
        %841 = vmatpush1.bf16.msra.mxu0 %v802
        %842 = vmatprep.subr.bf16.mxu0 0
        %843 = vmatpush1.bf16.msra.mxu0 %v803
        %844 = vmatprep.subr.bf16.mxu0 0
        %845 = vmatpush1.bf16.msra.mxu0 %v804
        %846 = vmatprep.subr.bf16.mxu0 0
        %847 = vmatpush1.bf16.msra.mxu0 %v805
        %848 = vmatprep.subr.bf16.mxu0 0
        %849 = vmatpush1.bf16.msra.mxu0 %v806
        %850 = vmatprep.subr.bf16.mxu0 0
        %851 = vmatpush1.bf16.msra.mxu0 %v807
        %852 = vmatprep.subr.bf16.mxu0 0
        %853 = vmatpush1.bf16.msra.mxu0 %v808
        %854 = vmatprep.subr.bf16.mxu0 0
        %855 = vmatpush1.bf16.msra.mxu0 %v809
        %856 = vmatprep.subr.bf16.mxu0 0
        %857 = vmatpush1.bf16.msra.mxu0 %v810
        %858 = vmatprep.subr.bf16.mxu0 0
        %859 = vmatpush1.bf16.msra.mxu0 %v811
        %860 = vmatprep.mubr.bf16.mxu0 %v690
        %861 = vmatmul.mubr.bf16.gmra.mrb[0].mxu0 %v689
        %v862 = vpop.f32.mrb[0].mxu0
        %v863 = vadd.f32 %v730, %v862
        %v864 = vpop.f32.mrb[0].mxu0
        %v865 = vpop.f32.mrb[0].mxu0
        %v866 = vpop.f32.mrb[0].mxu0
        %867 = vdwg.mxu0
        %v868 = vtanh.pop %v863
        %v869 = vadd.f32 %v684, %v868
        %v870 = vpack.c.bf16 %v869, %v869
        %s871 = scalar_lea.vmem [#allocation9], 64
        %v872 = vld [vmem:[%s871] sm:$0xf]
        %v873 = vld [vmem:[%s871 + $0x4] sm:$0xf]
        %v874 = vld [vmem:[%s871 + $0x8] sm:$0xf]
        %v875 = vld [vmem:[%s871 + $0xc] sm:$0xf]
        %v876 = vld [vmem:[%s871 + $0x10] sm:$0xf]
        %v877 = vld [vmem:[%s871 + $0x14] sm:$0xf]
        %v878 = vld [vmem:[%s871 + $0x18] sm:$0xf]
        %v879 = vld [vmem:[%s871 + $0x1c] sm:$0xf]
        %v880 = vld [vmem:[%s871 + $0x20] sm:$0xf]
        %v881 = vld [vmem:[%s871 + $0x24] sm:$0xf]
        %v882 = vld [vmem:[%s871 + $0x28] sm:$0xf]
        %v883 = vld [vmem:[%s871 + $0x2c] sm:$0xf]
        %v884 = vld [vmem:[%s871 + $0x30] sm:$0xf]
        %v885 = vld [vmem:[%s871 + $0x34] sm:$0xf]
        %v886 = vld [vmem:[%s871 + $0x38] sm:$0xf]
        %v887 = vld [vmem:[%s871 + $0x3c] sm:$0xf]
        %s888 = scalar_lea.vmem %s5, 1
        %v889 = vld [vmem:[%s888] sm:$0x1]
        %v891 = vlaneseq
        %v892 = vshrl.u32 %v891, 7
        %v893 = vsub.s32 0, %v892
        %v894 = vrot.slane %v889, %v893
        %v912 = vunpack.c.l.b16 %v872
        %v913 = vunpack.c.l.b16 %v873
        %v914 = vunpack.c.l.b16 %v874
        %v915 = vunpack.c.l.b16 %v875
        %v916 = vunpack.c.l.b16 %v876
        %v917 = vunpack.c.l.b16 %v877
        %v918 = vunpack.c.l.b16 %v878
        %v919 = vunpack.c.l.b16 %v879
        %v920 = vunpack.c.l.b16 %v880
        %v921 = vunpack.c.l.b16 %v881
        %v922 = vunpack.c.l.b16 %v882
        %v923 = vunpack.c.l.b16 %v883
        %v924 = vunpack.c.l.b16 %v884
        %v925 = vunpack.c.l.b16 %v885
        %v926 = vunpack.c.l.b16 %v886
        %v927 = vunpack.c.l.b16 %v887
        %v928 = vpack.c.b16 %v913, %v912
        %v929 = vpack.c.b16 %v915, %v914
        %v930 = vpack.c.b16 %v917, %v916
        %v931 = vpack.c.b16 %v919, %v918
        %v932 = vpack.c.b16 %v921, %v920
        %v933 = vpack.c.b16 %v923, %v922
        %v934 = vpack.c.b16 %v925, %v924
        %v935 = vpack.c.b16 %v927, %v926
        %944 = vmatprep.subr.bf16.mxu0 0
        %945 = vmatpush1.bf16.msra.mxu0 %v928
        %946 = vmatprep.subr.bf16.mxu0 0
        %947 = vmatpush1.bf16.msra.mxu0 %v929
        %948 = vmatprep.subr.bf16.mxu0 0
        %949 = vmatpush1.bf16.msra.mxu0 %v930
        %950 = vmatprep.subr.bf16.mxu0 0
        %951 = vmatpush1.bf16.msra.mxu0 %v931
        %952 = vmatprep.subr.bf16.mxu0 0
        %953 = vmatpush1.bf16.msra.mxu0 %v932
        %954 = vmatprep.subr.bf16.mxu0 0
        %955 = vmatpush1.bf16.msra.mxu0 %v933
        %956 = vmatprep.subr.bf16.mxu0 0
        %957 = vmatpush1.bf16.msra.mxu0 %v934
        %958 = vmatprep.subr.bf16.mxu0 0
        %959 = vmatpush1.bf16.msra.mxu0 %v935
        %960 = vmatprep.subr.bf16.mxu0 0
        %961 = vmatpush1.bf16.msra.mxu0 0
        %962 = vmatprep.subr.bf16.mxu0 0
        %963 = vmatpush1.bf16.msra.mxu0 0
        %964 = vmatprep.subr.bf16.mxu0 0
        %965 = vmatpush1.bf16.msra.mxu0 0
        %966 = vmatprep.subr.bf16.mxu0 0
        %967 = vmatpush1.bf16.msra.mxu0 0
        %968 = vmatprep.subr.bf16.mxu0 0
        %969 = vmatpush1.bf16.msra.mxu0 0
        %970 = vmatprep.subr.bf16.mxu0 0
        %971 = vmatpush1.bf16.msra.mxu0 0
        %972 = vmatprep.subr.bf16.mxu0 0
        %973 = vmatpush1.bf16.msra.mxu0 0
        %974 = vmatprep.subr.bf16.mxu0 0
        %975 = vmatpush1.bf16.msra.mxu0 0
        %976 = vmatprep.mubr.bf16.mxu0 0
        %977 = vmatmul.mubr.bf16.gmra.mrb[0].mxu0 %v870
        %v978 = vpop.f32.mrb[0].mxu0
        %v979 = vadd.f32 %v894, %v978
        %v980 = vpop.f32.mrb[0].mxu0
        %v981 = vpop.f32.mrb[0].mxu0
        %v982 = vpop.f32.mrb[0].mxu0
        %983 = vdwg.mxu0
        %984 = vmax.xlane.f32.xlu0 %v979
        %v985 = vpop.xlane.xlu0 %984
        %v986 = vsub.f32 %v979, %v985
        %v987 = vmul.f32 %v986, 1.442695
        %v988 = vpow.pop %v987
        %989 = vadd.xlane.f32.xlu0 %v988
        %v990 = vpop.xlane.xlu0 %989
        %v991 = vlog2.pop %v990
        %v992 = vmul.f32 %v991, 0.6931472
        %v993 = vsub.f32 %v986, %v992
        %994 = vst [vmem:[%s683] sm:$0xff] %v869
        %995 = vst [vmem:[%s363] sm:$0xff] %v993
        %s996 = sand.u32 %s188, 1
        %s997 = scalar_lea.sflag [#allocation5], %s996
        %s998 = sand.u32 %s188, 1
        %s999 = smul.addr %s998, 8
        %s1000 = scalar_lea.vmem [#allocation11], %s999
        // Predicated region
        $region65: #{tpu_custom_call.1} parent=43 // pred_check
          %p1001 = pneg %p198
        $region66: #{tpu_custom_call.1} parent=43 // pred_check_branch
          %1003 = sbr.rel (%p1001) target = $region68
        $region67: #{tpu_custom_call.1} parent=43 // pred_region
          %s1005 = ssub.s32 128, 128
          %1006 = vsyncadd %s997, %s1005
          %s1007 = sadd.s32 %s32, %s33
          %s1008 = smul.addr %s1007, 128
          %s1009 = scalar_lea.hbm %s6, %s1008
          %s1011 = sshll.u32 %s1000, 4
          %s1012 = int_to_ptr.vmem [resolvable:$true] %s1011
          %1014 = dma.vmem_to_hbm [thread:$0]  %s1012, 128, %s1009, %s997
        $region68: #{tpu_custom_call.1} parent=43 // pred_fallthru
          _
        // Predicated region
        $region69: #{tpu_custom_call.1} parent=43 // pred_check
          %p1015 = pneg %p224
        $region70: #{tpu_custom_call.1} parent=43 // pred_check_branch
          %1017 = sbr.rel (%p1015) target = $region72
        $region71: #{tpu_custom_call.1} parent=43 // pred_region
          %s1019 = ssub.s32 256, 256
          %1020 = vsyncadd [#allocation13], %s1019
          %s1021 = smul.addr %s32, 128
          %s1022 = scalar_lea.hbm %s7, %s1021
          %s1023 = sshll.u32 [#allocation12], 4
          %s1024 = int_to_ptr.vmem [resolvable:$true] %s1023
          %1029 = dma.vmem_to_hbm [thread:$0]  %s1024, 256, %s1022, [#allocation13], 128, 128, 8
        $region72: #{tpu_custom_call.1} parent=43 // pred_fallthru
          _
        // Predicated region
        $region73: #{tpu_custom_call.1} parent=43 // pred_check
          %p1030 = pneg %p224
        $region74: #{tpu_custom_call.1} parent=43 // pred_check_branch
          %1032 = sbr.rel (%p1030) target = $region76
        $region75: #{tpu_custom_call.1} parent=43 // pred_region
          %1033 = dma.done [#allocation13], 256
        $region76: #{tpu_custom_call.1} parent=43 // pred_fallthru
          _
      $region44: #{tpu_custom_call.1} parent=5 // pred_fallthru
        _
      %p1034 = scmp.le.s32.totalorder 2, %s23
      // Predicated region
      $region77: #{tpu_custom_call.1} parent=5 // pred_check
        %p1035 = pneg %p1034
      $region78: #{tpu_custom_call.1} parent=5 // pred_check_branch
        %1037 = sbr.rel (%p1035) target = $region80
      $region79: #{tpu_custom_call.1} parent=5 // pred_region
        %s1038 = ssub.s32 %s23, 2
        // Predicated region
        $region81: #{tpu_custom_call.1} parent=79 // pred_check
          %p1039 = pneg %p204
        $region82: #{tpu_custom_call.1} parent=79 // pred_check_branch
          %1041 = sbr.rel (%p1039) target = $region84
        $region83: #{tpu_custom_call.1} parent=79 // pred_region
          %s1042 = sand.u32 %s189, 1
          %s1043 = scalar_lea.sflag [#allocation5], %s1042
          %s1044 = sand.u32 %s189, 1
          %s1045 = smul.addr %s1044, 8
          %s1046 = scalar_lea.vmem [#allocation11], %s1045
          %1047 = dma.done %s1043, 128
        $region84: #{tpu_custom_call.1} parent=79 // pred_fallthru
          _
      $region80: #{tpu_custom_call.1} parent=5 // pred_fallthru
        _
    $region6: #{tpu_custom_call.1} parent=1 // loop_footer
      %s27 = sadd.s32 1, %s23
    $region7: #{tpu_custom_call.1} parent=1 // loop_footer_branch
      %22 = sbr.rel target = $region3
    $region8: #{tpu_custom_call.1} parent=1 // loop_exit
      _
    %1048 = vsyncpa [#allocation4], 1
    %s1049 = scalar_lea.sflag [#allocation4], 1
    %1050 = vsyncpa %s1049, 1
    %1051 = vsyncpa [#allocation7], 1
    %s1052 = scalar_lea.sflag [#allocation7], 1
    %1053 = vsyncpa %s1052, 1
    %1054 = vsyncpa [#allocation10], 1
    %1055 = vsyncpa [#allocation5], 1
    %s1056 = scalar_lea.sflag [#allocation5], 1
    %1057 = vsyncpa %s1056, 1
    %1058 = vsyncpa [#allocation13], 1

</llo_original>
